<compile_context>
chip_gen: v5e
topology: v5e:2x2
jax: 0.10.0
libtpu: 0.0.40
codegen_flags: <defaults>
</compile_context>

<pallas_src>
import jax
import jax.numpy as jnp
from jax.experimental import pallas as pl
from jax.experimental.pallas import tpu as pltpu

OBS_SIZE = 2      # MountainCarContinuous-v0 observation dim
ACTION_SIZE = 1   # MountainCarContinuous-v0 action dim (kernel assumes 1)
HIDDEN = 128
LANE = 128        # batch tile granularity (lane width of the packed output)


def policy_kernel(xt_ref, w1_ref, b1_ref, w2c_ref, b2_ref, mean_ref):
    # xt_ref:  (OBS_SIZE, TB)   observations, batch along lanes
    # w1_ref:  (HIDDEN, OBS_SIZE)   == PyTorch fc[0].weight
    # b1_ref:  (HIDDEN, 1)
    # w2c_ref: (HIDDEN, 1)          == PyTorch fc[2].weight reshaped to a column
    # b2_ref:  (1, 1) in SMEM (scalar)
    # mean_ref:(1, TB)              lane-packed, compact output
    xt = xt_ref[...]
    w1 = w1_ref[...]

    # fc1: K = OBS_SIZE = 2 -> VPU fused multiply-adds (MXU pass would be ~wasted).
    # w1[:, k:k+1] is a (HIDDEN,1) column (one cheap lane broadcast per k, reused
    # across all lane blocks); xt[k:k+1, :] broadcasts along sublanes (cheap).
    h = b1_ref[...] + w1[:, 0:1] * xt[0:1, :]
    for k in range(1, OBS_SIZE):                 # static, unrolled at trace time
        h = h + w1[:, k:k + 1] * xt[k:k + 1, :]
    h = jnp.maximum(h, 0.0)                      # (HIDDEN, TB)

    # fc2: N = ACTION_SIZE = 1 -> VPU multiply + sublane reduction; the result
    # (1, TB) is already lane-major, so the store needs no relayout.
    m = jnp.sum(h * w2c_ref[...], axis=0, keepdims=True)    # (1, TB)
    mean_ref[...] = (m + b2_ref[0, 0]).astype(mean_ref.dtype)


def _round_up(n, m):
    return ((n + m - 1) // m) * m


def _cdiv(a, b):
    return -(-a // b)


def policy_forward(x, w1, b1, w2, b2, log_std, *, tb=2048):
    """PPO actor forward.

    x:       (B, OBS_SIZE) f32
    w1:      (HIDDEN, OBS_SIZE)     -- PyTorch fc[0].weight layout
    b1:      (HIDDEN,)              -- fc[0].bias
    w2:      (ACTION_SIZE, HIDDEN)  -- fc[2].weight layout
    b2:      (ACTION_SIZE,)         -- fc[2].bias
    log_std: (ACTION_SIZE,)
    Returns (mean (B, ACTION_SIZE), std (ACTION_SIZE,)).
    """
    assert ACTION_SIZE == 1, "kernel is specialized to ACTION_SIZE == 1"
    B = x.shape[0]

    # ---- batch tiling: minimize padding; >=2 tiles for rollout batches so the
    # ("parallel",) batch axis can span both v7x TensorCores. ----------------
    n_tiles = max(1, _cdiv(B, tb))
    if B >= 2 * LANE:
        n_tiles = max(n_tiles, 2)
    tb_eff = _round_up(_cdiv(B, n_tiles), LANE)   # multiple of 128 (lane-packed out)
    Bp = n_tiles * tb_eff

    # Batch on the lane axis: pad, then transpose to (OBS_SIZE, Bp).
    xt = jnp.pad(x, ((0, Bp - B), (0, 0))).T          # (OBS_SIZE, Bp)
    b1_col = b1.reshape(HIDDEN, 1)                    # (HIDDEN, 1)
    w2_col = w2.reshape(HIDDEN, 1)                    # (HIDDEN, 1)
    b2_s = b2.reshape(1, 1)                           # (1, 1) scalar -> SMEM

    mean_row = pl.pallas_call(
        policy_kernel,
        out_shape=jax.ShapeDtypeStruct((1, Bp), jnp.float32),
        grid=(n_tiles,),
        in_specs=[
            # x^T: tiled over the batch (lane) axis.
            pl.BlockSpec((OBS_SIZE, tb_eff), lambda i: (0, i)),
            # Weights/biases: constant index_map -> DMA'd once, stay resident.
            pl.BlockSpec((HIDDEN, OBS_SIZE), lambda i: (0, 0)),
            pl.BlockSpec((HIDDEN, 1), lambda i: (0, 0)),
            pl.BlockSpec((HIDDEN, 1), lambda i: (0, 0)),
            # b2: single scalar -> SMEM, no VMEM tile / vector DMA.
            pl.BlockSpec(memory_space=pltpu.MemorySpace.SMEM),
        ],
        # Compact lane-dense output: one f32 per batch row.
        out_specs=pl.BlockSpec((1, tb_eff), lambda i: (0, i)),
        compiler_params=pltpu.CompilerParams(
            # Batch axis is embarrassingly parallel -> shard across v7x's 2 TCs.
            dimension_semantics=("parallel",),
        ),
    )(xt, w1, b1_col, w2_col, b2_s)

    mean = mean_row[0, :B].reshape(B, ACTION_SIZE)
    # std is input-independent: compute once outside the kernel.
    std = jnp.exp(log_std)
    return mean, std


def init_params(key):
    """Deterministic init mimicking nn.Linear defaults (uniform +/- 1/sqrt(fan_in)),
    stored in PyTorch weight layouts."""
    k1, k2, k3, k4 = jax.random.split(key, 4)
    bound1 = 1.0 / (OBS_SIZE ** 0.5)
    bound2 = 1.0 / (HIDDEN ** 0.5)
    w1 = jax.random.uniform(k1, (HIDDEN, OBS_SIZE), jnp.float32, -bound1, bound1)
    b1 = jax.random.uniform(k2, (HIDDEN,), jnp.float32, -bound1, bound1)
    w2 = jax.random.uniform(k3, (ACTION_SIZE, HIDDEN), jnp.float32, -bound2, bound2)
    b2 = jax.random.uniform(k4, (ACTION_SIZE,), jnp.float32, -bound2, bound2)
    log_std = jnp.zeros((ACTION_SIZE,), jnp.float32)   # nn.Parameter(torch.zeros(act))
    return w1, b1, w2, b2, log_std


if __name__ == "__main__":
    key = jax.random.PRNGKey(0)
    pkey, xkey = jax.random.split(key)
    w1, b1, w2, b2, log_std = init_params(pkey)

    B = 8
    x = jax.random.normal(xkey, (B, OBS_SIZE), jnp.float32)

    mean, std = policy_forward(x, w1, b1, w2, b2, log_std)
    jax.block_until_ready((mean, std))

    # Pure-JAX reference in PyTorch semantics (HIGHEST so the host dots are true f32).
    hp = jax.lax.Precision.HIGHEST
    ref_h = jnp.maximum(jnp.dot(x, w1.T, precision=hp) + b1, 0.0)
    ref_mean = jnp.dot(ref_h, w2.T, precision=hp) + b2
    ref_std = jnp.exp(log_std)

    assert mean.shape == (B, ACTION_SIZE) and std.shape == (ACTION_SIZE,)
    assert jnp.allclose(mean, ref_mean, atol=1e-4, rtol=1e-4), "mean mismatch"
    assert jnp.allclose(std, ref_std, atol=1e-6), "std mismatch"

    print("KERNEL_OK")
</pallas_src>

<mosaic_0001>
module attributes {stable_mosaic.version = 11 : i64} {
  func.func @policy_kernel(%arg0: i32, %arg1: memref<2x128xf32, #tpu.memory_space<vmem>>, %arg2: memref<128x2xf32, #tpu.memory_space<vmem>>, %arg3: memref<128x1xf32, #tpu.memory_space<vmem>>, %arg4: memref<128x1xf32, #tpu.memory_space<vmem>>, %arg5: memref<1x1xf32, #tpu.memory_space<smem>>, %arg6: memref<1x128xf32, #tpu.memory_space<vmem>>) attributes {dimension_semantics = [#tpu.dimension_semantics<parallel>], iteration_bounds = array<i64: 1>, scalar_prefetch = 0 : i64, scratch_operands = 0 : i64, tpu.core_type = #tpu.core_type<tc>, window_params = [{transform_indices = @transform_0, window_bounds = array<i64: 2, 128>}, {pipeline_mode = #tpu.pipeline_mode<synchronous>, transform_indices = @transform_1, window_bounds = array<i64: 128, 2>}, {pipeline_mode = #tpu.pipeline_mode<synchronous>, transform_indices = @transform_2, window_bounds = array<i64: 128, 1>}, {pipeline_mode = #tpu.pipeline_mode<synchronous>, transform_indices = @transform_3, window_bounds = array<i64: 128, 1>}, {transform_indices = @transform_4, window_bounds = array<i64: 1, 1>}, {transform_indices = @transform_5, window_bounds = array<i64: 1, 128>}]} {
    %c0 = arith.constant 0 : index
    %c0_0 = arith.constant 0 : index
    %0 = vector.load %arg1[%c0, %c0_0] : memref<2x128xf32, #tpu.memory_space<vmem>>, vector<2x128xf32>
    %c0_1 = arith.constant 0 : index
    %c0_2 = arith.constant 0 : index
    %1 = vector.load %arg2[%c0_1, %c0_2] : memref<128x2xf32, #tpu.memory_space<vmem>>, vector<128x2xf32>
    %c0_3 = arith.constant 0 : index
    %c0_4 = arith.constant 0 : index
    %2 = vector.load %arg3[%c0_3, %c0_4] : memref<128x1xf32, #tpu.memory_space<vmem>>, vector<128x1xf32>
    %3 = vector.extract_strided_slice %1 {offsets = [0, 0], sizes = [128, 1], strides = [1, 1]} : vector<128x2xf32> to vector<128x1xf32>
    %4 = vector.extract_strided_slice %0 {offsets = [0, 0], sizes = [1, 128], strides = [1, 1]} : vector<2x128xf32> to vector<1x128xf32>
    %5 = vector.broadcast %3 : vector<128x1xf32> to vector<128x128xf32>
    %6 = vector.broadcast %4 : vector<1x128xf32> to vector<128x128xf32>
    %7 = arith.mulf %5, %6 : vector<128x128xf32>
    %8 = vector.broadcast %2 : vector<128x1xf32> to vector<128x128xf32>
    %9 = arith.addf %8, %7 : vector<128x128xf32>
    %10 = vector.extract_strided_slice %1 {offsets = [0, 1], sizes = [128, 1], strides = [1, 1]} : vector<128x2xf32> to vector<128x1xf32>
    %11 = vector.extract_strided_slice %0 {offsets = [1, 0], sizes = [1, 128], strides = [1, 1]} : vector<2x128xf32> to vector<1x128xf32>
    %12 = vector.broadcast %10 : vector<128x1xf32> to vector<128x128xf32>
    %13 = vector.broadcast %11 : vector<1x128xf32> to vector<128x128xf32>
    %14 = arith.mulf %12, %13 : vector<128x128xf32>
    %15 = arith.addf %9, %14 : vector<128x128xf32>
    %cst = arith.constant 0.000000e+00 : f32
    %16 = vector.broadcast %cst : f32 to vector<128x128xf32>
    %17 = arith.maximumf %15, %16 : vector<128x128xf32>
    %c0_5 = arith.constant 0 : index
    %c0_6 = arith.constant 0 : index
    %18 = vector.load %arg4[%c0_5, %c0_6] : memref<128x1xf32, #tpu.memory_space<vmem>>, vector<128x1xf32>
    %19 = vector.broadcast %18 : vector<128x1xf32> to vector<128x128xf32>
    %20 = arith.mulf %17, %19 : vector<128x128xf32>
    %cst_7 = arith.constant dense<0.000000e+00> : vector<128xf32>
    %21 = vector.multi_reduction <add>, %20, %cst_7 [0] : vector<128x128xf32> to vector<128xf32>
    %22 = vector.shape_cast %21 : vector<128xf32> to vector<1x128xf32>
    %c0_8 = arith.constant 0 : index
    %c0_9 = arith.constant 0 : index
    %23 = memref.load %arg5[%c0_8, %c0_9] : memref<1x1xf32, #tpu.memory_space<smem>>
    %24 = vector.broadcast %23 : f32 to vector<1x128xf32>
    %25 = arith.addf %22, %24 : vector<1x128xf32>
    %c0_10 = arith.constant 0 : index
    %c0_11 = arith.constant 0 : index
    %26 = vector.load %arg6[%c0_10, %c0_11] : memref<1x128xf32, #tpu.memory_space<vmem>>, vector<1x128xf32>
    tpu.vector_store %arg6[%c0_10, %c0_11], %25 {strides = array<i32>} : memref<1x128xf32, #tpu.memory_space<vmem>>, vector<1x128xf32>,
    return
  }
  func.func @transform_0(%arg0: i32) -> (i32, i32) {
    %c0_i32 = arith.constant 0 : i32
    %c0_i32_0 = arith.constant 0 : i32
    return %c0_i32, %arg0 : i32, i32
  }
  func.func @transform_1(%arg0: i32) -> (i32, i32) {
    %c0_i32 = arith.constant 0 : i32
    %c0_i32_0 = arith.constant 0 : i32
    %c0_i32_1 = arith.constant 0 : i32
    return %c0_i32, %c0_i32_0 : i32, i32
  }
  func.func @transform_2(%arg0: i32) -> (i32, i32) {
    %c0_i32 = arith.constant 0 : i32
    %c0_i32_0 = arith.constant 0 : i32
    %c0_i32_1 = arith.constant 0 : i32
    return %c0_i32, %c0_i32_0 : i32, i32
  }
  func.func @transform_3(%arg0: i32) -> (i32, i32) {
    %c0_i32 = arith.constant 0 : i32
    %c0_i32_0 = arith.constant 0 : i32
    %c0_i32_1 = arith.constant 0 : i32
    return %c0_i32, %c0_i32_0 : i32, i32
  }
  func.func @transform_4(%arg0: i32) -> (i32, i32) {
    %c0_i32 = arith.constant 0 : i32
    %c0_i32_0 = arith.constant 0 : i32
    %c0_i32_1 = arith.constant 0 : i32
    return %c0_i32, %c0_i32_0 : i32, i32
  }
  func.func @transform_5(%arg0: i32) -> (i32, i32) {
    %c0_i32 = arith.constant 0 : i32
    %c0_i32_0 = arith.constant 0 : i32
    return %c0_i32, %arg0 : i32, i32
  }
}

</mosaic_0001>

<llo_original>
// kernel: tpu_custom_call.1
$region0: #{tpu_custom_call.1}
  #allocation0 [shape = 'u32[]', space=smem, size = 0x4, offset = 0x4, fixed_abs, tag = 'smem constant byte address 0x4 - core index']
  #allocation1 [shape = 'u32[72,128]{1,0:T(1,128)}', space=vmem, size = 0x9000, scoped, tag = 'internal scratch']
  #allocation2 [shape = 'f32[1,1]{1,0:T(1,128)S(6)}', space=smem, size = 0x200, scoped, tag = 'scoped memory for tpu_custom_call.1']
  %s0 = inlined_call_operand.vmem [shape: f32[2,128], index: 0, kind: input, shape index: {}]
  %s1 = inlined_call_operand.vmem [shape: f32[128,2], index: 1, kind: input, shape index: {}]
  %s2 = inlined_call_operand.vmem [shape: f32[128,1], index: 2, kind: input, shape index: {}]
  %s3 = inlined_call_operand.vmem [shape: f32[128,1], index: 3, kind: input, shape index: {}]
  %s4 = inlined_call_operand.<no memory space> [shape: f32[1,1], index: 4, kind: input, shape index: {}]
  %s5 = inlined_call_operand.hbm [shape: f32[1,128], index: 5, kind: output, shape index: {}]
  %s6 = sld [smem:[#allocation0]]
  $region30: #{tpu_custom_call.1} parent=0
    _
  %s8 = ssub.s32 1, %s6
  %s9 = scalar_select 0, %s8, %s6
  %10 = sst [smem:[#allocation2]] %s4
  $region1: #{tpu_custom_call.1} parent=0
    #allocation3 [shape = 'u8[512]{0}', space=vmem, size = 0x400, scoped, tag = 'output window, operand 0, single buffered']
    #allocation4 [shape = 's32[1]{0}', space=sflag, size = 0x4, scoped, tag = 'scoped memory for tpu_custom_call.1']
    %11 = vsyncpa [#allocation4], 0
    // Predicated region
    $region2: #{tpu_custom_call.1} parent=1 // pred_check
      _
    $region3: #{tpu_custom_call.1} parent=1 // pred_check_branch
      %13 = sbr.rel (0) target = $region5
    $region4: #{tpu_custom_call.1} parent=1 // pred_region
      _
    $region5: #{tpu_custom_call.1} parent=1 // pred_fallthru
      _
    // Predicated region
    $region6: #{tpu_custom_call.1} parent=1 // pred_check
      _
    $region7: #{tpu_custom_call.1} parent=1 // pred_check_branch
      %15 = sbr.rel (0) target = $region9
    $region8: #{tpu_custom_call.1} parent=1 // pred_region
      _
    $region9: #{tpu_custom_call.1} parent=1 // pred_fallthru
      _
    // Predicated region
    $region10: #{tpu_custom_call.1} parent=1 // pred_check
      _
    $region11: #{tpu_custom_call.1} parent=1 // pred_check_branch
      %17 = sbr.rel (0) target = $region13
    $region12: #{tpu_custom_call.1} parent=1 // pred_region
      _
    $region13: #{tpu_custom_call.1} parent=1 // pred_fallthru
      _
    // Predicated region
    $region14: #{tpu_custom_call.1} parent=1 // pred_check
      _
    $region15: #{tpu_custom_call.1} parent=1 // pred_check_branch
      %19 = sbr.rel (0) target = $region17
    $region16: #{tpu_custom_call.1} parent=1 // pred_region
      _
    $region17: #{tpu_custom_call.1} parent=1 // pred_fallthru
      _
    // Predicated region
    $region18: #{tpu_custom_call.1} parent=1 // pred_check
      _
    $region19: #{tpu_custom_call.1} parent=1 // pred_check_branch
      %21 = sbr.rel (0) target = $region21
    $region20: #{tpu_custom_call.1} parent=1 // pred_region
      _
    $region21: #{tpu_custom_call.1} parent=1 // pred_fallthru
      _
    %v22 = vld [vmem:[%s0] sm:$0x3]
    %v23 = vld [vmem:[%s1] sm:$0xff]
    %v24 = vld [vmem:[%s1 + $0x8] sm:$0xff]
    %v25 = vld [vmem:[%s1 + $0x10] sm:$0xff]
    %v26 = vld [vmem:[%s1 + $0x18] sm:$0xff]
    %v27 = vld [vmem:[%s1 + $0x20] sm:$0xff]
    %v28 = vld [vmem:[%s1 + $0x28] sm:$0xff]
    %v29 = vld [vmem:[%s1 + $0x30] sm:$0xff]
    %v30 = vld [vmem:[%s1 + $0x38] sm:$0xff]
    %v31 = vld [vmem:[%s1 + $0x40] sm:$0xff]
    %v32 = vld [vmem:[%s1 + $0x48] sm:$0xff]
    %v33 = vld [vmem:[%s1 + $0x50] sm:$0xff]
    %v34 = vld [vmem:[%s1 + $0x58] sm:$0xff]
    %v35 = vld [vmem:[%s1 + $0x60] sm:$0xff]
    %v36 = vld [vmem:[%s1 + $0x68] sm:$0xff]
    %v37 = vld [vmem:[%s1 + $0x70] sm:$0xff]
    %v38 = vld [vmem:[%s1 + $0x78] sm:$0xff]
    %v39 = vld [vmem:[%s2] sm:$0xff]
    %v40 = vld [vmem:[%s2 + $0x8] sm:$0xff]
    %v41 = vld [vmem:[%s2 + $0x10] sm:$0xff]
    %v42 = vld [vmem:[%s2 + $0x18] sm:$0xff]
    %v43 = vld [vmem:[%s2 + $0x20] sm:$0xff]
    %v44 = vld [vmem:[%s2 + $0x28] sm:$0xff]
    %v45 = vld [vmem:[%s2 + $0x30] sm:$0xff]
    %v46 = vld [vmem:[%s2 + $0x38] sm:$0xff]
    %v47 = vld [vmem:[%s2 + $0x40] sm:$0xff]
    %v48 = vld [vmem:[%s2 + $0x48] sm:$0xff]
    %v49 = vld [vmem:[%s2 + $0x50] sm:$0xff]
    %v50 = vld [vmem:[%s2 + $0x58] sm:$0xff]
    %v51 = vld [vmem:[%s2 + $0x60] sm:$0xff]
    %v52 = vld [vmem:[%s2 + $0x68] sm:$0xff]
    %v53 = vld [vmem:[%s2 + $0x70] sm:$0xff]
    %v54 = vld [vmem:[%s2 + $0x78] sm:$0xff]
    %56 = vset.pattern.permute.xlu0 0
    %57 = vperm.xlu0 %56, %v23
    %v58 = vpop.permute.xlu0 %57
    %61 = vset.pattern.permute.xlu0 0
    %62 = vperm.xlu0 %61, %v24
    %v63 = vpop.permute.xlu0 %62
    %66 = vset.pattern.permute.xlu0 0
    %67 = vperm.xlu0 %66, %v25
    %v68 = vpop.permute.xlu0 %67
    %71 = vset.pattern.permute.xlu0 0
    %72 = vperm.xlu0 %71, %v26
    %v73 = vpop.permute.xlu0 %72
    %76 = vset.pattern.permute.xlu0 0
    %77 = vperm.xlu0 %76, %v27
    %v78 = vpop.permute.xlu0 %77
    %81 = vset.pattern.permute.xlu0 0
    %82 = vperm.xlu0 %81, %v28
    %v83 = vpop.permute.xlu0 %82
    %86 = vset.pattern.permute.xlu0 0
    %87 = vperm.xlu0 %86, %v29
    %v88 = vpop.permute.xlu0 %87
    %91 = vset.pattern.permute.xlu0 0
    %92 = vperm.xlu0 %91, %v30
    %v93 = vpop.permute.xlu0 %92
    %96 = vset.pattern.permute.xlu0 0
    %97 = vperm.xlu0 %96, %v31
    %v98 = vpop.permute.xlu0 %97
    %101 = vset.pattern.permute.xlu0 0
    %102 = vperm.xlu0 %101, %v32
    %v103 = vpop.permute.xlu0 %102
    %106 = vset.pattern.permute.xlu0 0
    %107 = vperm.xlu0 %106, %v33
    %v108 = vpop.permute.xlu0 %107
    %111 = vset.pattern.permute.xlu0 0
    %112 = vperm.xlu0 %111, %v34
    %v113 = vpop.permute.xlu0 %112
    %116 = vset.pattern.permute.xlu0 0
    %117 = vperm.xlu0 %116, %v35
    %v118 = vpop.permute.xlu0 %117
    %121 = vset.pattern.permute.xlu0 0
    %122 = vperm.xlu0 %121, %v36
    %v123 = vpop.permute.xlu0 %122
    %126 = vset.pattern.permute.xlu0 0
    %127 = vperm.xlu0 %126, %v37
    %v128 = vpop.permute.xlu0 %127
    %131 = vset.pattern.permute.xlu0 0
    %132 = vperm.xlu0 %131, %v38
    %v133 = vpop.permute.xlu0 %132
    %v135 = vperm.slane %v22, 0
    %v136 = vmul.f32 %v58, %v135
    %v137 = vmul.f32 %v63, %v135
    %v138 = vmul.f32 %v68, %v135
    %v139 = vmul.f32 %v73, %v135
    %v140 = vmul.f32 %v78, %v135
    %v141 = vmul.f32 %v83, %v135
    %v142 = vmul.f32 %v88, %v135
    %v143 = vmul.f32 %v93, %v135
    %v144 = vmul.f32 %v98, %v135
    %v145 = vmul.f32 %v103, %v135
    %v146 = vmul.f32 %v108, %v135
    %v147 = vmul.f32 %v113, %v135
    %v148 = vmul.f32 %v118, %v135
    %v149 = vmul.f32 %v123, %v135
    %v150 = vmul.f32 %v128, %v135
    %v151 = vmul.f32 %v133, %v135
    %153 = vset.pattern.permute.xlu0 0
    %154 = vperm.xlu0 %153, %v39
    %v155 = vpop.permute.xlu0 %154
    %158 = vset.pattern.permute.xlu0 0
    %159 = vperm.xlu0 %158, %v40
    %v160 = vpop.permute.xlu0 %159
    %163 = vset.pattern.permute.xlu0 0
    %164 = vperm.xlu0 %163, %v41
    %v165 = vpop.permute.xlu0 %164
    %168 = vset.pattern.permute.xlu0 0
    %169 = vperm.xlu0 %168, %v42
    %v170 = vpop.permute.xlu0 %169
    %173 = vset.pattern.permute.xlu0 0
    %174 = vperm.xlu0 %173, %v43
    %v175 = vpop.permute.xlu0 %174
    %178 = vset.pattern.permute.xlu0 0
    %179 = vperm.xlu0 %178, %v44
    %v180 = vpop.permute.xlu0 %179
    %183 = vset.pattern.permute.xlu0 0
    %184 = vperm.xlu0 %183, %v45
    %v185 = vpop.permute.xlu0 %184
    %188 = vset.pattern.permute.xlu0 0
    %189 = vperm.xlu0 %188, %v46
    %v190 = vpop.permute.xlu0 %189
    %193 = vset.pattern.permute.xlu0 0
    %194 = vperm.xlu0 %193, %v47
    %v195 = vpop.permute.xlu0 %194
    %198 = vset.pattern.permute.xlu0 0
    %199 = vperm.xlu0 %198, %v48
    %v200 = vpop.permute.xlu0 %199
    %203 = vset.pattern.permute.xlu0 0
    %204 = vperm.xlu0 %203, %v49
    %v205 = vpop.permute.xlu0 %204
    %208 = vset.pattern.permute.xlu0 0
    %209 = vperm.xlu0 %208, %v50
    %v210 = vpop.permute.xlu0 %209
    %213 = vset.pattern.permute.xlu0 0
    %214 = vperm.xlu0 %213, %v51
    %v215 = vpop.permute.xlu0 %214
    %218 = vset.pattern.permute.xlu0 0
    %219 = vperm.xlu0 %218, %v52
    %v220 = vpop.permute.xlu0 %219
    %223 = vset.pattern.permute.xlu0 0
    %224 = vperm.xlu0 %223, %v53
    %v225 = vpop.permute.xlu0 %224
    %228 = vset.pattern.permute.xlu0 0
    %229 = vperm.xlu0 %228, %v54
    %v230 = vpop.permute.xlu0 %229
    %v232 = vadd.f32 %v155, %v136
    %v233 = vadd.f32 %v160, %v137
    %v234 = vadd.f32 %v165, %v138
    %v235 = vadd.f32 %v170, %v139
    %v236 = vadd.f32 %v175, %v140
    %v237 = vadd.f32 %v180, %v141
    %v238 = vadd.f32 %v185, %v142
    %v239 = vadd.f32 %v190, %v143
    %v240 = vadd.f32 %v195, %v144
    %v241 = vadd.f32 %v200, %v145
    %v242 = vadd.f32 %v205, %v146
    %v243 = vadd.f32 %v210, %v147
    %v244 = vadd.f32 %v215, %v148
    %v245 = vadd.f32 %v220, %v149
    %v246 = vadd.f32 %v225, %v150
    %v247 = vadd.f32 %v230, %v151
    %248 = vset.pattern.permute.xlu0 1
    %249 = vperm.xlu0 %248, %v23
    %v250 = vpop.permute.xlu0 %249
    %252 = vset.pattern.permute.xlu0 1
    %253 = vperm.xlu0 %252, %v24
    %v254 = vpop.permute.xlu0 %253
    %256 = vset.pattern.permute.xlu0 1
    %257 = vperm.xlu0 %256, %v25
    %v258 = vpop.permute.xlu0 %257
    %260 = vset.pattern.permute.xlu0 1
    %261 = vperm.xlu0 %260, %v26
    %v262 = vpop.permute.xlu0 %261
    %264 = vset.pattern.permute.xlu0 1
    %265 = vperm.xlu0 %264, %v27
    %v266 = vpop.permute.xlu0 %265
    %268 = vset.pattern.permute.xlu0 1
    %269 = vperm.xlu0 %268, %v28
    %v270 = vpop.permute.xlu0 %269
    %272 = vset.pattern.permute.xlu0 1
    %273 = vperm.xlu0 %272, %v29
    %v274 = vpop.permute.xlu0 %273
    %276 = vset.pattern.permute.xlu0 1
    %277 = vperm.xlu0 %276, %v30
    %v278 = vpop.permute.xlu0 %277
    %280 = vset.pattern.permute.xlu0 1
    %281 = vperm.xlu0 %280, %v31
    %v282 = vpop.permute.xlu0 %281
    %284 = vset.pattern.permute.xlu0 1
    %285 = vperm.xlu0 %284, %v32
    %v286 = vpop.permute.xlu0 %285
    %288 = vset.pattern.permute.xlu0 1
    %289 = vperm.xlu0 %288, %v33
    %v290 = vpop.permute.xlu0 %289
    %292 = vset.pattern.permute.xlu0 1
    %293 = vperm.xlu0 %292, %v34
    %v294 = vpop.permute.xlu0 %293
    %296 = vset.pattern.permute.xlu0 1
    %297 = vperm.xlu0 %296, %v35
    %v298 = vpop.permute.xlu0 %297
    %300 = vset.pattern.permute.xlu0 1
    %301 = vperm.xlu0 %300, %v36
    %v302 = vpop.permute.xlu0 %301
    %304 = vset.pattern.permute.xlu0 1
    %305 = vperm.xlu0 %304, %v37
    %v306 = vpop.permute.xlu0 %305
    %308 = vset.pattern.permute.xlu0 1
    %309 = vperm.xlu0 %308, %v38
    %v310 = vpop.permute.xlu0 %309
    %v312 = vperm.slane %v22, 1
    %v313 = vmul.f32 %v250, %v312
    %v314 = vmul.f32 %v254, %v312
    %v315 = vmul.f32 %v258, %v312
    %v316 = vmul.f32 %v262, %v312
    %v317 = vmul.f32 %v266, %v312
    %v318 = vmul.f32 %v270, %v312
    %v319 = vmul.f32 %v274, %v312
    %v320 = vmul.f32 %v278, %v312
    %v321 = vmul.f32 %v282, %v312
    %v322 = vmul.f32 %v286, %v312
    %v323 = vmul.f32 %v290, %v312
    %v324 = vmul.f32 %v294, %v312
    %v325 = vmul.f32 %v298, %v312
    %v326 = vmul.f32 %v302, %v312
    %v327 = vmul.f32 %v306, %v312
    %v328 = vmul.f32 %v310, %v312
    %v329 = vadd.f32 %v232, %v313
    %v330 = vadd.f32 %v233, %v314
    %v331 = vadd.f32 %v234, %v315
    %v332 = vadd.f32 %v235, %v316
    %v333 = vadd.f32 %v236, %v317
    %v334 = vadd.f32 %v237, %v318
    %v335 = vadd.f32 %v238, %v319
    %v336 = vadd.f32 %v239, %v320
    %v337 = vadd.f32 %v240, %v321
    %v338 = vadd.f32 %v241, %v322
    %v339 = vadd.f32 %v242, %v323
    %v340 = vadd.f32 %v243, %v324
    %v341 = vadd.f32 %v244, %v325
    %v342 = vadd.f32 %v245, %v326
    %v343 = vadd.f32 %v246, %v327
    %v344 = vadd.f32 %v247, %v328
    %v345 = vmax.f32 %v329, 0.0
    %v346 = vmax.f32 %v330, 0.0
    %v347 = vmax.f32 %v331, 0.0
    %v348 = vmax.f32 %v332, 0.0
    %v349 = vmax.f32 %v333, 0.0
    %v350 = vmax.f32 %v334, 0.0
    %v351 = vmax.f32 %v335, 0.0
    %v352 = vmax.f32 %v336, 0.0
    %v353 = vmax.f32 %v337, 0.0
    %v354 = vmax.f32 %v338, 0.0
    %v355 = vmax.f32 %v339, 0.0
    %v356 = vmax.f32 %v340, 0.0
    %v357 = vmax.f32 %v341, 0.0
    %v358 = vmax.f32 %v342, 0.0
    %v359 = vmax.f32 %v343, 0.0
    %v360 = vmax.f32 %v344, 0.0
    %v361 = vld [vmem:[%s3] sm:$0xff]
    %v362 = vld [vmem:[%s3 + $0x8] sm:$0xff]
    %v363 = vld [vmem:[%s3 + $0x10] sm:$0xff]
    %v364 = vld [vmem:[%s3 + $0x18] sm:$0xff]
    %v365 = vld [vmem:[%s3 + $0x20] sm:$0xff]
    %v366 = vld [vmem:[%s3 + $0x28] sm:$0xff]
    %v367 = vld [vmem:[%s3 + $0x30] sm:$0xff]
    %v368 = vld [vmem:[%s3 + $0x38] sm:$0xff]
    %v369 = vld [vmem:[%s3 + $0x40] sm:$0xff]
    %v370 = vld [vmem:[%s3 + $0x48] sm:$0xff]
    %v371 = vld [vmem:[%s3 + $0x50] sm:$0xff]
    %v372 = vld [vmem:[%s3 + $0x58] sm:$0xff]
    %v373 = vld [vmem:[%s3 + $0x60] sm:$0xff]
    %v374 = vld [vmem:[%s3 + $0x68] sm:$0xff]
    %v375 = vld [vmem:[%s3 + $0x70] sm:$0xff]
    %v376 = vld [vmem:[%s3 + $0x78] sm:$0xff]
    %378 = vset.pattern.permute.xlu0 0
    %379 = vperm.xlu0 %378, %v361
    %v380 = vpop.permute.xlu0 %379
    %383 = vset.pattern.permute.xlu0 0
    %384 = vperm.xlu0 %383, %v362
    %v385 = vpop.permute.xlu0 %384
    %388 = vset.pattern.permute.xlu0 0
    %389 = vperm.xlu0 %388, %v363
    %v390 = vpop.permute.xlu0 %389
    %393 = vset.pattern.permute.xlu0 0
    %394 = vperm.xlu0 %393, %v364
    %v395 = vpop.permute.xlu0 %394
    %398 = vset.pattern.permute.xlu0 0
    %399 = vperm.xlu0 %398, %v365
    %v400 = vpop.permute.xlu0 %399
    %403 = vset.pattern.permute.xlu0 0
    %404 = vperm.xlu0 %403, %v366
    %v405 = vpop.permute.xlu0 %404
    %408 = vset.pattern.permute.xlu0 0
    %409 = vperm.xlu0 %408, %v367
    %v410 = vpop.permute.xlu0 %409
    %413 = vset.pattern.permute.xlu0 0
    %414 = vperm.xlu0 %413, %v368
    %v415 = vpop.permute.xlu0 %414
    %418 = vset.pattern.permute.xlu0 0
    %419 = vperm.xlu0 %418, %v369
    %v420 = vpop.permute.xlu0 %419
    %423 = vset.pattern.permute.xlu0 0
    %424 = vperm.xlu0 %423, %v370
    %v425 = vpop.permute.xlu0 %424
    %428 = vset.pattern.permute.xlu0 0
    %429 = vperm.xlu0 %428, %v371
    %v430 = vpop.permute.xlu0 %429
    %433 = vset.pattern.permute.xlu0 0
    %434 = vperm.xlu0 %433, %v372
    %v435 = vpop.permute.xlu0 %434
    %438 = vset.pattern.permute.xlu0 0
    %439 = vperm.xlu0 %438, %v373
    %v440 = vpop.permute.xlu0 %439
    %443 = vset.pattern.permute.xlu0 0
    %444 = vperm.xlu0 %443, %v374
    %v445 = vpop.permute.xlu0 %444
    %448 = vset.pattern.permute.xlu0 0
    %449 = vperm.xlu0 %448, %v375
    %v450 = vpop.permute.xlu0 %449
    %453 = vset.pattern.permute.xlu0 0
    %454 = vperm.xlu0 %453, %v376
    %v455 = vpop.permute.xlu0 %454
    %v457 = vmul.f32 %v345, %v380
    %v458 = vmul.f32 %v346, %v385
    %v459 = vmul.f32 %v347, %v390
    %v460 = vmul.f32 %v348, %v395
    %v461 = vmul.f32 %v349, %v400
    %v462 = vmul.f32 %v350, %v405
    %v463 = vmul.f32 %v351, %v410
    %v464 = vmul.f32 %v352, %v415
    %v465 = vmul.f32 %v353, %v420
    %v466 = vmul.f32 %v354, %v425
    %v467 = vmul.f32 %v355, %v430
    %v468 = vmul.f32 %v356, %v435
    %v469 = vmul.f32 %v357, %v440
    %v470 = vmul.f32 %v358, %v445
    %v471 = vmul.f32 %v359, %v450
    %v472 = vmul.f32 %v360, %v455
    %v473 = vadd.f32 %v457, %v458
    %v474 = vadd.f32 %v473, %v459
    %v475 = vadd.f32 %v474, %v460
    %v476 = vadd.f32 %v475, %v461
    %v477 = vadd.f32 %v476, %v462
    %v478 = vadd.f32 %v477, %v463
    %v479 = vadd.f32 %v478, %v464
    %v480 = vadd.f32 %v479, %v465
    %v481 = vadd.f32 %v480, %v466
    %v482 = vadd.f32 %v481, %v467
    %v483 = vadd.f32 %v482, %v468
    %v484 = vadd.f32 %v483, %v469
    %v485 = vadd.f32 %v484, %v470
    %v486 = vadd.f32 %v485, %v471
    %v487 = vadd.f32 %v486, %v472
    %v488 = vrot.slane %v487, 4
    %v489 = vadd.f32 %v487, %v488
    %v490 = vrot.slane %v489, 2
    %v491 = vadd.f32 %v489, %v490
    %v492 = vrot.slane %v491, 1
    %v493 = vadd.f32 %v491, %v492
    %s494 = sld [smem:[#allocation2]]
    %v495 = vstv %s494
    %v496 = vadd.f32 %v493, %v495
    %497 = vst [vmem:[#allocation3] sm:$0x1] %v496
    // Predicated region
    $region22: #{tpu_custom_call.1} parent=1 // pred_check
      _
    $region23: #{tpu_custom_call.1} parent=1 // pred_check_branch
      %499 = sbr.rel (0) target = $region25
    $region24: #{tpu_custom_call.1} parent=1 // pred_region
      %501 = vsyncadd [#allocation4], 0
      %s503 = sshll.u32 [#allocation3], 4
      %s504 = int_to_ptr.vmem [resolvable:$true] %s503
      %s505 = sshll.u32 %s5, 4
      %s506 = int_to_ptr.hbm [resolvable:$true] %s505
      %508 = dma.vmem_to_hbm [thread:$0]  %s504, 16, %s506, [#allocation4]
    $region25: #{tpu_custom_call.1} parent=1 // pred_fallthru
      _
    // Predicated region
    $region26: #{tpu_custom_call.1} parent=1 // pred_check
      _
    $region27: #{tpu_custom_call.1} parent=1 // pred_check_branch
      %510 = sbr.rel (0) target = $region29
    $region28: #{tpu_custom_call.1} parent=1 // pred_region
      %512 = dma.done [#allocation4], 16
    $region29: #{tpu_custom_call.1} parent=1 // pred_fallthru
      _
    %513 = vsyncpa [#allocation4], 1

</llo_original>
